<compile_context>
chip_gen: v7x
topology: tpu7x:2x2x1
jax: 0.10.0
libtpu: 0.0.40
codegen_flags: <defaults>
</compile_context>

<pallas_src>
import functools

import jax
import jax.numpy as jnp
from jax import lax
from jax.experimental import pallas as pl
from jax.experimental.pallas import tpu as pltpu


# -----------------------------------------------------------------------------
# Device / tile-size helpers
# -----------------------------------------------------------------------------
# Per-buffer budget for one streamed hidden tile.  Review: ~8 MiB everywhere
# (v5e was 2 MiB, v7x was 4 MiB; v6e 12-16 MiB only if a profile shows exposed
# per-step overhead).  Double-buffered this is ~16 MiB, well inside the
# explicit 32 MiB vmem_limit_bytes.
_HIDDEN_TILE_BUDGET = 8 * 1024 * 1024
_VMEM_LIMIT = 32 * 1024 * 1024


def _device_kind():
    try:
        return jax.devices()[0].device_kind.lower()
    except Exception:  # pragma: no cover
        return ""


def _is_v5e(kind):
    return ("v5e" in kind) or ("v5 lite" in kind) or ("v5lite" in kind)


def _is_v7(kind):
    return "v7" in kind


def _largest_divisor_at_most(n, cap):
    cap = max(1, min(n, cap))
    for d in range(cap, 0, -1):
        if n % d == 0:
            return d
    return 1


def _pick_block(dim, target, align):
    """Largest block <= target that is a multiple of `align` and divides `dim`
    (or `dim` itself), so the grid covers the array exactly and the (8, 128)
    constraint on the trailing block dims is satisfied."""
    if dim <= target:
        return dim
    b = (min(target, dim) // align) * align
    while b >= align:
        if dim % b == 0:
            return b
        b -= align
    return dim


# -----------------------------------------------------------------------------
# Kernels
# -----------------------------------------------------------------------------
def _padded_pool_kernel(h_ref, len_ref, out_ref, acc_ref, *,
                        pool_type, use_mxu, s_block):
    """Fast path: 0/1 *padding* mask rebuilt in-kernel from per-row lengths.

    Grid: (B/bt, H/ht, S/st) with S innermost ('arbitrary').
      h_ref:   (bt, st, ht)  hidden tile, native dtype
      len_ref: (bt, 1, 1)    f32 number of valid positions per row
      out_ref: (bt, 1, ht)   written on the last S tile
      acc_ref: (bt, ht)      f32 (bf16 only for the bf16 'max' chain)
    """
    s = pl.program_id(2)
    s_last = pl.num_programs(2) - 1

    @pl.when(s == 0)
    def _init():
        if pool_type == "max":
            acc_ref[...] = jnp.full(acc_ref.shape, -jnp.inf, acc_ref.dtype)
        else:
            acc_ref[...] = jnp.zeros(acc_ref.shape, acc_ref.dtype)

    h = h_ref[...]                                    # (bt, st, ht)
    bt, st, _ = h_ref.shape
    lens_f = len_ref[...]                             # (bt, 1, 1) f32
    lens_i = lens_f.astype(jnp.int32)
    start = s * s_block

    if pool_type == "avg" and use_mxu:
        # Mask-multiply and the S-reduction both run on the MXU (f32
        # accumulation); exact for a 0/1 mask.  Only the tiny iota compare
        # touches the VALU.
        pos = lax.broadcasted_iota(jnp.int32, (bt, 1, st), 2) + start
        m = (pos < lens_i).astype(h.dtype)            # (bt, 1, st)
        part = jnp.einsum("bks,bsh->bkh", m, h,
                          preferred_element_type=jnp.float32)
        acc_ref[...] += part[:, 0, :]
    else:
        # Masked positions contribute 0 — exactly the reference h * mask.
        pos = lax.broadcasted_iota(jnp.int32, (bt, st, 1), 1) + start
        valid = pos < lens_i                          # (bt, st, 1) lane-broadcast
        x = jnp.where(valid, h, 0).astype(acc_ref.dtype)
        if pool_type == "max":
            acc_ref[...] = jnp.maximum(acc_ref[...], jnp.max(x, axis=1))
        else:
            acc_ref[...] += jnp.sum(x, axis=1)

    @pl.when(s == s_last)
    def _finalize():
        val = acc_ref[...]
        if pool_type == "avg":
            # Exact reference denominator; a fully masked row yields inf/nan,
            # same as the PyTorch module.
            val = val / lens_f[:, 0, :]
        out_ref[...] = jnp.expand_dims(val, 1).astype(out_ref.dtype)


def _masked_pool_kernel(h_ref, m_ref, out_ref, acc_ref, cnt_ref=None, *, pool_type):
    """General path: streams the mask (f32) and multiplies, exactly like the
    reference.  For masks that are not simple 0/1 prefix padding masks."""
    s = pl.program_id(2)
    s_last = pl.num_programs(2) - 1

    @pl.when(s == 0)
    def _init():
        if pool_type == "max":
            acc_ref[...] = jnp.full(acc_ref.shape, -jnp.inf, acc_ref.dtype)
        else:
            acc_ref[...] = jnp.zeros(acc_ref.shape, acc_ref.dtype)
            cnt_ref[...] = jnp.zeros(cnt_ref.shape, cnt_ref.dtype)

    h = h_ref[...].astype(jnp.float32)     # (bt, st, ht)
    m = m_ref[...]                         # (bt, st, 1), already f32
    x = h * m
    if pool_type == "max":
        acc_ref[...] = jnp.maximum(acc_ref[...], jnp.max(x, axis=1))
    else:
        acc_ref[...] += jnp.sum(x, axis=1)
        cnt_ref[...] += jnp.sum(m, axis=1)             # (bt, 1)

    @pl.when(s == s_last)
    def _finalize():
        val = acc_ref[...]
        if pool_type == "avg":
            val = val / cnt_ref[...]
        out_ref[...] = jnp.expand_dims(val, 1).astype(out_ref.dtype)


# -----------------------------------------------------------------------------
# Forward
# -----------------------------------------------------------------------------
def my_pooler_forward(hidden_states, attention_mask, pool_type="cls", *,
                      assume_padding_mask=True,
                      batch_block=None, seq_block=None, hidden_block=None):
    """hidden_states: (B, S, H); attention_mask: (B, S). Returns (B, H).

    assume_padding_mask=True (default) treats attention_mask as a 0/1 padding
    mask: per-row lengths replace the (B, S, 1) mask stream entirely.  Set it
    to False for arbitrary (non-prefix / non-binary) masks to get exact
    multiply-by-mask semantics.
    """
    B, S, H = hidden_states.shape
    if attention_mask.shape != (B, S):
        raise ValueError("attention_mask must be (B, S)")
    out_dtype = hidden_states.dtype

    if pool_type == "cls":
        # Review: no Pallas kernel needed — the slice reads only the row-0 slab
        # from HBM and the dtype already matches.
        return hidden_states[:, 0, :]

    if pool_type not in ("max", "avg"):
        raise ValueError(f"unknown pool_type {pool_type!r}")

    kind = _device_kind()
    is_v5e = _is_v5e(kind)
    two_core = _is_v7(kind)            # v7x: 2 TensorCores per chip
    itemsize = jnp.dtype(hidden_states.dtype).itemsize

    # ---- batch / hidden tiles (batch tile lives on a leading block dim) ----
    if batch_block is not None:
        bt = int(batch_block)
        if B % bt != 0:
            raise ValueError("batch_block must divide B")
    else:
        bt = _largest_divisor_at_most(B, 8)

    if hidden_block is not None:
        ht = int(hidden_block)
        if H % ht != 0 or not (ht == H or ht % 128 == 0):
            raise ValueError("hidden_block must divide H and be a multiple of "
                             "128 (or equal H)")
    else:
        ht = H

    # v7x: guarantee >= 2 programs across the 'parallel' axes so both
    # TensorCores get work.  bt sits on a leading block dim, so bt=1 is legal.
    if two_core and (B // bt) * (H // ht) < 2:
        if B >= 2 and batch_block is None:
            bt = _largest_divisor_at_most(B, B // 2)
        elif hidden_block is None and H % 256 == 0:
            ht = H // 2

    # ---- sequence tile from the per-buffer VMEM budget ----
    if seq_block is not None:
        st = int(seq_block)
        if S % st != 0 or not (st == S or st % 8 == 0):
            raise ValueError("seq_block must divide S and be a multiple of 8 "
                             "(or equal S)")
    else:
        per_row = bt * ht * itemsize
        if not assume_padding_mask:
            per_row += bt * 128 * 4       # lane-padded (bt, st, 1) f32 mask tile
        st_target = max(8, _HIDDEN_TILE_BUDGET // max(1, per_row))
        st = _pick_block(S, st_target, 8)

    grid = (B // bt, H // ht, S // st)
    compiler_params = pltpu.CompilerParams(
        dimension_semantics=("parallel", "parallel", "arbitrary"),
        vmem_limit_bytes=_VMEM_LIMIT,
    )
    # TODO(synk): on v7x, if a profile shows exposed DMA at S-tile boundaries,
    # add pipeline_mode=pl.Buffered(3) here (costs one extra hidden tile of VMEM).
    hidden_spec = pl.BlockSpec((bt, st, ht), lambda b, hh, s: (b, s, hh))
    out_spec = pl.BlockSpec((bt, 1, ht), lambda b, hh, s: (b, 0, hh))
    out_shape = jax.ShapeDtypeStruct((B, 1, H), out_dtype)

    if assume_padding_mask:
        # Per-row valid lengths replace the mask stream (and the avg denominator).
        lens = attention_mask.astype(jnp.float32).sum(axis=-1).reshape(B, 1, 1)
        use_mxu = hidden_states.dtype == jnp.bfloat16
        acc_dtype = (jnp.bfloat16
                     if (pool_type == "max"
                         and hidden_states.dtype == jnp.bfloat16
                         and not is_v5e)
                     else jnp.float32)
        kernel = functools.partial(_padded_pool_kernel, pool_type=pool_type,
                                   use_mxu=use_mxu, s_block=st)
        out3 = pl.pallas_call(
            kernel,
            out_shape=out_shape,
            grid=grid,
            in_specs=[hidden_spec,
                      pl.BlockSpec((bt, 1, 1), lambda b, hh, s: (b, 0, 0))],
            out_specs=out_spec,
            scratch_shapes=[pltpu.VMEM((bt, ht), acc_dtype)],
            compiler_params=compiler_params,
        )(hidden_states, lens)
    else:
        # Exact multiply-by-mask semantics for arbitrary masks (f32 mask per
        # the review's correctness note).
        mask = attention_mask.astype(jnp.float32).reshape(B, S, 1)
        kernel = functools.partial(_masked_pool_kernel, pool_type=pool_type)
        scratch = [pltpu.VMEM((bt, ht), jnp.float32)]
        if pool_type == "avg":
            scratch.append(pltpu.VMEM((bt, 1), jnp.float32))
        out3 = pl.pallas_call(
            kernel,
            out_shape=out_shape,
            grid=grid,
            in_specs=[hidden_spec,
                      pl.BlockSpec((bt, st, 1), lambda b, hh, s: (b, s, 0))],
            out_specs=out_spec,
            scratch_shapes=scratch,
            compiler_params=compiler_params,
        )(hidden_states, mask)

    return out3.reshape(B, H)


class MyPoolerPallas:
    """Mirrors MyPooler: dense/activation exist in __init__ but are unused in forward()."""

    def __init__(self, pool_type="cls", in_size=768, out_size=768, key=None):
        # TODO(synk): nn.Linear / nn.Tanh are never used by MyPooler.forward();
        # parameters are kept only for shape fidelity and never enter compute.
        if key is None:
            key = jax.random.PRNGKey(0)
        kw, kb = jax.random.split(key)
        bound = 1.0 / float(in_size) ** 0.5
        self.dense_w = jax.random.uniform(kw, (out_size, in_size),
                                          minval=-bound, maxval=bound,
                                          dtype=jnp.float32)
        self.dense_b = jax.random.uniform(kb, (out_size,),
                                          minval=-bound, maxval=bound,
                                          dtype=jnp.float32)
        self.pool_type = pool_type

    def __call__(self, hidden_states, attention_mask):
        return my_pooler_forward(hidden_states, attention_mask, self.pool_type)


# -----------------------------------------------------------------------------
# Pure-JAX reference & self-test
# -----------------------------------------------------------------------------
def _reference(hidden_states, attention_mask, pool_type):
    h = hidden_states.astype(jnp.float32)
    m = attention_mask.astype(jnp.float32)
    if pool_type == "cls":
        out = h[:, 0]
    elif pool_type == "max":
        out = jnp.max(h * m[:, :, None], axis=1)
    elif pool_type == "avg":
        out = jnp.sum(h * m[:, :, None], axis=1) / jnp.sum(m, axis=-1)[:, None]
    else:
        raise ValueError(pool_type)
    return out.astype(hidden_states.dtype)


if __name__ == "__main__":
    key = jax.random.PRNGKey(0)
    failures = []

    def check(name, out, ref, tol):
        ok = (out.shape == ref.shape) and bool(
            jnp.allclose(out.astype(jnp.float32), ref.astype(jnp.float32),
                         atol=tol, rtol=tol))
        if not ok:
            failures.append(name)

    def run_case(B, S, H, dtype, tol, **kw):
        kh = jax.random.fold_in(key, B * 100000 + S * 1000 + H)
        h = jax.random.normal(kh, (B, S, H), dtype=jnp.float32).astype(dtype)
        mask = jnp.broadcast_to(
            (jnp.arange(S)[None, :] < (S - 2)).astype(jnp.float32), (B, S))
        for pt in ("cls", "max", "avg"):
            out = jax.block_until_ready(my_pooler_forward(h, mask, pt, **kw))
            check(f"{pt}-{dtype}-{(B, S, H)}", out, _reference(h, mask, pt), tol)

    # Small shapes consistent with the module (batch=2, seq=8, hidden=32).
    run_case(2, 8, 32, jnp.float32, 1e-5)
    # Native bf16 path (bf16 'max' chain + MXU 'avg' reduction, f32 accumulate).
    run_case(2, 8, 32, jnp.bfloat16, 2e-2)
    # Multi-tile S grid to exercise the pl.when init/accumulate/finalize path.
    run_case(2, 256, 128, jnp.float32, 1e-5, seq_block=128)
    run_case(2, 256, 128, jnp.bfloat16, 2e-2, seq_block=64)

    # General (non-prefix 0/1) mask via the streamed-mask fallback path.
    kh = jax.random.fold_in(key, 7)
    h = jax.random.normal(kh, (2, 8, 32), dtype=jnp.float32)
    holey = (jax.random.uniform(jax.random.fold_in(key, 8), (2, 8)) > 0.3)
    holey = holey.at[:, 0].set(True).astype(jnp.float32)
    for pt in ("max", "avg"):
        out = jax.block_until_ready(
            my_pooler_forward(h, holey, pt, assume_padding_mask=False))
        check(f"general-{pt}", out, _reference(h, holey, pt), 1e-5)

    # Exercise the class wrapper (unused dense/tanh params, like the PyTorch module).
    pooler = MyPoolerPallas(pool_type="avg", in_size=32, out_size=32)
    m_all = jnp.ones((2, 8), dtype=jnp.float32)
    out = jax.block_until_ready(pooler(h, m_all))
    check("class-avg", out, _reference(h, m_all, "avg"), 1e-5)

    if failures:
        print("MISMATCH:", failures)
    else:
        print("KERNEL_OK")
</pallas_src>

<mosaic_0001>
module attributes {stable_mosaic.version = 11 : i64} {
  func.func @_padded_pool_kernel(%arg0: i32, %arg1: i32, %arg2: i32, %arg3: memref<2x8x32xf32, #tpu.memory_space<vmem>>, %arg4: memref<2x1x1xf32, #tpu.memory_space<vmem>>, %arg5: memref<2x1x32xf32, #tpu.memory_space<vmem>>, %arg6: memref<2x32xf32, #tpu.memory_space<vmem>>) attributes {dimension_semantics = [#tpu.dimension_semantics<parallel>, #tpu.dimension_semantics<parallel>, #tpu.dimension_semantics<arbitrary>], iteration_bounds = array<i64: 1, 1, 1>, scalar_prefetch = 0 : i64, scratch_operands = 1 : i64, tpu.core_type = #tpu.core_type<tc>, window_params = [{transform_indices = @transform_0, window_bounds = array<i64: 2, 8, 32>}, {transform_indices = @transform_1, window_bounds = array<i64: 2, 1, 1>}, {transform_indices = @transform_2, window_bounds = array<i64: 2, 1, 32>}]} {
    %c0_i32 = arith.constant 0 : i32
    %0 = arith.cmpi eq, %arg2, %c0_i32 : i32
    %1 = arith.extui %0 : i1 to i32
    %c0_i32_0 = arith.constant 0 : i32
    %2 = arith.cmpi ne, %1, %c0_i32_0 : i32
    scf.if %2 {
      %cst_13 = arith.constant 0xFF800000 : f32
      %24 = vector.broadcast %cst_13 : f32 to vector<2x32xf32>
      %c0_14 = arith.constant 0 : index
      %c0_15 = arith.constant 0 : index
      %25 = vector.load %arg6[%c0_14, %c0_15] : memref<2x32xf32, #tpu.memory_space<vmem>>, vector<2x32xf32>
      tpu.vector_store %arg6[%c0_14, %c0_15], %24 {strides = array<i32>} : memref<2x32xf32, #tpu.memory_space<vmem>>, vector<2x32xf32>,
    } else {
    }
    %c0 = arith.constant 0 : index
    %c0_1 = arith.constant 0 : index
    %c0_2 = arith.constant 0 : index
    %3 = vector.load %arg3[%c0, %c0_1, %c0_2] : memref<2x8x32xf32, #tpu.memory_space<vmem>>, vector<2x8x32xf32>
    %c0_3 = arith.constant 0 : index
    %c0_4 = arith.constant 0 : index
    %c0_5 = arith.constant 0 : index
    %4 = vector.load %arg4[%c0_3, %c0_4, %c0_5] : memref<2x1x1xf32, #tpu.memory_space<vmem>>, vector<2x1x1xf32>
    %5 = arith.fptosi %4 : vector<2x1x1xf32> to vector<2x1x1xi32>
    %c8_i32 = arith.constant 8 : i32
    %6 = arith.muli %arg2, %c8_i32 : i32
    %7 = tpu.iota {dimensions = array<i32: 1>} : vector<2x8x1xi32>
    %8 = vector.broadcast %6 : i32 to vector<2x8x1xi32>
    %9 = arith.addi %7, %8 : vector<2x8x1xi32>
    %10 = vector.broadcast %5 : vector<2x1x1xi32> to vector<2x8x1xi32>
    %11 = arith.cmpi slt, %9, %10 : vector<2x8x1xi32>
    %c0_i32_6 = arith.constant 0 : i32
    %12 = arith.sitofp %c0_i32_6 : i32 to f32
    %13 = vector.shape_cast %11 : vector<2x8x1xi1> to vector<2x8x1xi1>
    %14 = vector.broadcast %13 : vector<2x8x1xi1> to vector<2x8x32xi1>
    %15 = vector.broadcast %12 : f32 to vector<2x8x32xf32>
    %16 = arith.select %14, %3, %15 : vector<2x8x32xi1>, vector<2x8x32xf32>
    %c0_7 = arith.constant 0 : index
    %c0_8 = arith.constant 0 : index
    %17 = vector.load %arg6[%c0_7, %c0_8] : memref<2x32xf32, #tpu.memory_space<vmem>>, vector<2x32xf32>
    %cst = arith.constant dense<0xFF800000> : vector<2x32xf32>
    %18 = vector.multi_reduction <maximumf>, %16, %cst [1] : vector<2x8x32xf32> to vector<2x32xf32>
    %19 = arith.maximumf %17, %18 : vector<2x32xf32>
    %c0_9 = arith.constant 0 : index
    %c0_10 = arith.constant 0 : index
    %20 = vector.load %arg6[%c0_9, %c0_10] : memref<2x32xf32, #tpu.memory_space<vmem>>, vector<2x32xf32>
    tpu.vector_store %arg6[%c0_9, %c0_10], %19 {strides = array<i32>} : memref<2x32xf32, #tpu.memory_space<vmem>>, vector<2x32xf32>,
    %c0_i32_11 = arith.constant 0 : i32
    %21 = arith.cmpi eq, %arg2, %c0_i32_11 : i32
    %22 = arith.extui %21 : i1 to i32
    %c0_i32_12 = arith.constant 0 : i32
    %23 = arith.cmpi ne, %22, %c0_i32_12 : i32
    scf.if %23 {
      %c0_13 = arith.constant 0 : index
      %c0_14 = arith.constant 0 : index
      %24 = vector.load %arg6[%c0_13, %c0_14] : memref<2x32xf32, #tpu.memory_space<vmem>>, vector<2x32xf32>
      %25 = vector.shape_cast %24 : vector<2x32xf32> to vector<2x1x32xf32>
      %c0_15 = arith.constant 0 : index
      %c0_16 = arith.constant 0 : index
      %c0_17 = arith.constant 0 : index
      %26 = vector.load %arg5[%c0_15, %c0_16, %c0_17] : memref<2x1x32xf32, #tpu.memory_space<vmem>>, vector<2x1x32xf32>
      tpu.vector_store %arg5[%c0_15, %c0_16, %c0_17], %25 {strides = array<i32>} : memref<2x1x32xf32, #tpu.memory_space<vmem>>, vector<2x1x32xf32>,
    } else {
    }
    return
  }
  func.func @transform_0(%arg0: i32, %arg1: i32, %arg2: i32) -> (i32, i32, i32) {
    %c0_i32 = arith.constant 0 : i32
    return %arg0, %arg2, %arg1 : i32, i32, i32
  }
  func.func @transform_1(%arg0: i32, %arg1: i32, %arg2: i32) -> (i32, i32, i32) {
    %c0_i32 = arith.constant 0 : i32
    %c0_i32_0 = arith.constant 0 : i32
    %c0_i32_1 = arith.constant 0 : i32
    return %arg0, %c0_i32, %c0_i32_0 : i32, i32, i32
  }
  func.func @transform_2(%arg0: i32, %arg1: i32, %arg2: i32) -> (i32, i32, i32) {
    %c0_i32 = arith.constant 0 : i32
    %c0_i32_0 = arith.constant 0 : i32
    return %arg0, %c0_i32, %arg1 : i32, i32, i32
  }
}

</mosaic_0001>

<llo_original>
// kernel: tpu_custom_call.1
$region0: #{tpu_custom_call.1}
  #allocation0 [shape = 'u32[]', space=smem, size = 0x4, offset = 0x4, fixed_abs, tag = 'smem constant byte address 0x4 - core index']
  #allocation1 [shape = 'u32[144,128]{1,0:T(1,128)}', space=vmem, size = 0x12000, scoped, tag = 'internal scratch']
  #allocation2 [shape = 'f32[2,32]{1,0:T(2,128)}', space=vmem, size = 0x400, scoped, tag = 'scratch operand']
  %s0 = inlined_call_operand.hbm [shape: f32[2,8,32], index: 0, kind: input, shape index: {}]
  %s1 = inlined_call_operand.vmem [shape: f32[2,1,1], index: 1, kind: input, shape index: {}]
  %s2 = inlined_call_operand.hbm [shape: f32[2,1,32], index: 2, kind: output, shape index: {}]
  %s3 = sld [smem:[#allocation0]]
  $region30: #{tpu_custom_call.1} parent=0
    _
  %s5 = ssub.s32 1, %s3
  %s6 = scalar_select 0, %s5, %s3
  $region1: #{tpu_custom_call.1} parent=0
    #allocation3 [shape = 'u8[8192]{0}', space=vmem, size = 0x2000, scoped, tag = 'input window, operand 0, single buffered']
    #allocation4 [shape = 's32[1]{0}', space=sflag, size = 0x4, scoped, tag = 'scoped memory for tpu_custom_call.1']
    #allocation5 [shape = 's32[1]{0}', space=sflag, size = 0x4, scoped, tag = 'scoped memory for tpu_custom_call.1']
    #allocation6 [shape = 'u8[1024]{0}', space=vmem, size = 0x400, scoped, tag = 'output window, operand 0, single buffered']
    %7 = vsyncpa [#allocation4], 0
    %8 = vsyncpa [#allocation5], 0
    // Predicated region
    $region2: #{tpu_custom_call.1} parent=1 // pred_check
      _
    $region3: #{tpu_custom_call.1} parent=1 // pred_check_branch
      %10 = sbr.rel (0) target = $region5
    $region4: #{tpu_custom_call.1} parent=1 // pred_region
      %s12 = ssub.s32 256, 256
      %13 = vsyncadd [#allocation4], %s12
      %s14 = sshll.u32 [#allocation3], 4
      %s15 = int_to_ptr.vmem [resolvable:$true] %s14
      %20 = dma.hbm_to_vmem [thread:$0]  %s0, 256, %s15, [#allocation4], 128, 128, 8
    $region5: #{tpu_custom_call.1} parent=1 // pred_fallthru
      _
    // Predicated region
    $region6: #{tpu_custom_call.1} parent=1 // pred_check
      _
    $region7: #{tpu_custom_call.1} parent=1 // pred_check_branch
      %22 = sbr.rel (0) target = $region9
    $region8: #{tpu_custom_call.1} parent=1 // pred_region
      _
    $region9: #{tpu_custom_call.1} parent=1 // pred_fallthru
      _
    // Predicated region
    $region10: #{tpu_custom_call.1} parent=1 // pred_check
      _
    $region11: #{tpu_custom_call.1} parent=1 // pred_check_branch
      %24 = sbr.rel (0) target = $region13
    $region12: #{tpu_custom_call.1} parent=1 // pred_region
      %25 = dma.done [#allocation4], 256
    $region13: #{tpu_custom_call.1} parent=1 // pred_fallthru
      _
    %p26 = scmp.eq.s32.totalorder 0, 0
    // Predicated region
    $region14: #{tpu_custom_call.1} parent=1 // pred_check
      %p27 = pneg %p26
    $region15: #{tpu_custom_call.1} parent=1 // pred_check_branch
      %29 = sbr.rel (%p27) target = $region17
    $region16: #{tpu_custom_call.1} parent=1 // pred_region
      %vm30 = vcmask 254976
      %31 = vst.msk [vmem:[#allocation2] sm:$0x3] %vm30, -inf
    $region17: #{tpu_custom_call.1} parent=1 // pred_fallthru
      _
    %v32 = vld [vmem:[#allocation3] sm:$0xff]
    %v33 = vld [vmem:[#allocation3 + $0x8] sm:$0xff]
    %v34 = vld [vmem:[%s1] sm:$0x1]
    %v35 = vld [vmem:[%s1 + $0x1] sm:$0x1]
    %v36 = vcvt.f32.s32.to.zero.pseudo %v34
    %v37 = vcvt.f32.s32.to.zero.pseudo %v35
    %s38 = smul.u32 0, 8
    %v39 = vlaneseq
    %v40 = vshrl.u32 %v39, 7
    %v41 = vstv %s38
    %v42 = vadd.s32 %v40, %v41
    %v43 = vlaneseq
    %v44 = vshrl.u32 %v43, 7
    %v45 = vsub.s32 0, %v44
    %v46 = vrot.slane %v36, %v45
    %v47 = vlaneseq
    %v48 = vshrl.u32 %v47, 7
    %v49 = vsub.s32 0, %v48
    %v50 = vrot.slane %v37, %v49
    %vm51 = vcmp.lt.s32.totalorder %v42, %v46
    %vm52 = vcmp.lt.s32.totalorder %v42, %v50
    %v53 = vsel %vm51, 1, 0
    %v54 = vsel %vm52, 1, 0
    %55 = vset.pattern.permute.xlu0 0
    %56 = vperm.xlu0 %55, %v53
    %v57 = vpop.permute.xlu0 %56
    %58 = vset.pattern.permute.xlu0 0
    %59 = vperm.xlu0 %58, %v54
    %v60 = vpop.permute.xlu0 %59
    %vm61 = vcmp.eq.s32.totalorder %v57, 1
    %vm62 = vcmp.eq.s32.totalorder %v60, 1
    %v63 = vsel %vm61, %v32, 0.0
    %v64 = vsel %vm62, %v33, 0.0
    %v65 = vld [vmem:[#allocation2] sm:$0x3]
    %vm66 = vcmask 261120
    %v67 = vsel %vm66, %v63, -inf
    %v68 = vrot.slane %v67, 4
    %v69 = vmax.f32 %v67, %v68
    %v70 = vrot.slane %v69, 2
    %v71 = vmax.f32 %v69, %v70
    %v72 = vrot.slane %v71, 1
    %v73 = vmax.f32 %v71, %v72
    %v74 = vsel %vm66, %v64, -inf
    %v75 = vrot.slane %v74, 4
    %v76 = vmax.f32 %v74, %v75
    %v77 = vrot.slane %v76, 2
    %v78 = vmax.f32 %v76, %v77
    %v79 = vrot.slane %v78, 1
    %v80 = vmax.f32 %v78, %v79
    %vm83 = vcmask 1041409
    %v84 = vsel %vm83, %v80, %v73
    %v86 = vmax.f32 %v65, %v84
    %vm87 = vcmask 254976
    %88 = vst.msk [vmem:[#allocation2] sm:$0x3] %vm87, %v86
    // Predicated region
    $region18: #{tpu_custom_call.1} parent=1 // pred_check
      %p89 = pneg %p26
    $region19: #{tpu_custom_call.1} parent=1 // pred_check_branch
      %91 = sbr.rel (%p89) target = $region21
    $region20: #{tpu_custom_call.1} parent=1 // pred_region
      %v92 = vld [vmem:[#allocation2] sm:$0x3]
      %v95 = vunpack.c.l.s4 1966171168
      %v96 = vunpack.c.0.s8 %v95
      %v97 = vlaneseq
      %v98 = vshrl.u32 %v97, 7
      %v99 = vsub.s32 %v96, %v98
      %v100 = vrot.slane %v92, %v99
      %v101 = vcombine.high %v100, %v100
      %v103 = vunpack.c.l.s4 1966171168
      %v104 = vunpack.c.0.s8 %v103
      %v105 = vlaneseq
      %v106 = vshrl.u32 %v105, 7
      %v107 = vsub.s32 %v104, %v106
      %v108 = vrot.slane %v100, %v107
      %v110 = vunpack.c.l.s4 1966171168
      %v111 = vunpack.c.0.s8 %v110
      %v112 = vlaneseq
      %v113 = vshrl.u32 %v112, 7
      %v114 = vsub.s32 %v111, %v113
      %v115 = vrot.slane %v101, %v114
      %vm118 = vcmask 253952
      %119 = vst.msk [vmem:[#allocation6] sm:$0x1] %vm118, %v108
      %120 = vst.msk [vmem:[#allocation6 + $0x1] sm:$0x1] %vm118, %v115
    $region21: #{tpu_custom_call.1} parent=1 // pred_fallthru
      _
    // Predicated region
    $region22: #{tpu_custom_call.1} parent=1 // pred_check
      _
    $region23: #{tpu_custom_call.1} parent=1 // pred_check_branch
      %122 = sbr.rel (0) target = $region25
    $region24: #{tpu_custom_call.1} parent=1 // pred_region
      %s124 = ssub.s32 32, 32
      %125 = vsyncadd [#allocation5], %s124
      %s126 = sshll.u32 [#allocation6], 4
      %s127 = int_to_ptr.vmem [resolvable:$true] %s126
      %132 = dma.vmem_to_hbm [thread:$0]  %s127, 32, %s2, [#allocation5], 16, 16, 1
    $region25: #{tpu_custom_call.1} parent=1 // pred_fallthru
      _
    // Predicated region
    $region26: #{tpu_custom_call.1} parent=1 // pred_check
      _
    $region27: #{tpu_custom_call.1} parent=1 // pred_check_branch
      %134 = sbr.rel (0) target = $region29
    $region28: #{tpu_custom_call.1} parent=1 // pred_region
      %135 = dma.done [#allocation5], 32
    $region29: #{tpu_custom_call.1} parent=1 // pred_fallthru
      _
    %136 = vsyncpa [#allocation4], 1
    %137 = vsyncpa [#allocation5], 1

</llo_original>
